<compile_context>
chip_gen: v5e
topology: v5e:2x2
jax: 0.10.0
libtpu: 0.0.40
codegen_flags: <defaults>
</compile_context>

<pallas_src>
import functools

import jax
import jax.numpy as jnp
from jax.experimental import pallas as pl
from jax.experimental.pallas import tpu as pltpu

BN_EPS = 1e-5      # PyTorch BatchNorm2d default (train mode, biased batch stats)
CPAD = 128         # every channel dim zero-padded to one lane width
KTAPS = ((0, 0), (0, 1), (0, 2), (1, 0), (1, 1), (1, 2), (2, 0), (2, 1), (2, 2))

# (k, cin, cout, transposed, bn_relu) -- static network description
LAYERS = [
    (3,   1,  16, False, True),   # conv1   / bn1 / r1
    (3,  16, 100, False, True),   # conv2   / bn2 / r2
    (1, 100,  32, False, True),   # conv3   / bn3 / r3
    (3,  32,  32, False, True),   # conv4   / bn4 / r4
    (1,  32, 100, False, True),   # conv5   / bn5 / r5
    (1, 100,  32, True,  True),   # deconv5 / bn6 / r6
    (3,  32,  32, True,  True),   # deconv4 / bn7 / r7
    (1,  32, 100, True,  True),   # deconv3 / bn8 / r8
    (3, 100,  16, True,  True),   # deconv2 / bn9 / r9
    (3,  16,   1, True,  False),  # deconv1 (no bn / relu)
]
# fused stages: conv layers between pool / unpool boundaries share one pallas_call
STAGES = ((0, 1), (2, 3, 4), (5, 6, 7), (8, 9))


def _layer_cfg(li):
    k, cin, cout, _, bnr = LAYERS[li]
    if k == 1:
        tpg, kp = 1, CPAD
    else:
        # taps-per-128-lane-group for dense K packing (cin must divide 128)
        tpg = CPAD // cin if CPAD % cin == 0 else 1
        tpg = min(tpg, 9)
        kp = CPAD * (-(-9 // tpg))          # ceil(9 / tpg) groups of 128 lanes
    return {"k": k, "cin": cin, "cout": cout, "bn": bnr, "relu": bnr,
            "tpg": tpg, "kp": kp}


STAGE_CFGS = tuple(tuple(_layer_cfg(li) for li in st) for st in STAGES)


# ----------------------------------------------------------------------------
# Fused multi-layer conv + bias + BN + ReLU stage kernel
# ----------------------------------------------------------------------------
def _make_stage_kernel(cfgs, n, h, w, roll_fwd):
    """roll_fwd=True means pltpu.roll matches jnp.roll (out[i] = in[i-shift])."""
    m = n * h * w

    def _roll_to(x, delta, axis, size):
        # returns y with y[i] = x[(i + delta) % size] along `axis`
        if delta % size == 0:
            return x
        shift = (-delta) % size if roll_fwd else delta % size
        return pltpu.roll(x, shift, axis)

    def kernel(x_ref, w_ref, bn_ref, o_ref):
        # (m, 1) spatial coordinates of each flattened NHWC row (border masks)
        row = jax.lax.broadcasted_iota(jnp.int32, (m, 1), 0)
        xi = row % w
        yi = (row // w) % h
        border = {}                               # one predicate per (dy, dx)
        for (dy, dx) in KTAPS:
            conds = []
            if dy == 0:
                conds.append(yi >= 1)
            elif dy == 2:
                conds.append(yi < h - 1)
            if dx == 0:
                conds.append(xi >= 1)
            elif dx == 2:
                conds.append(xi < w - 1)
            if conds:
                v = conds[0]
                for c in conds[1:]:
                    v = v & c
                border[(dy, dx)] = v

        a = x_ref[...].astype(jnp.float32)        # (m, CPAD), padded lanes == 0
        w_off = 0
        for li, cfg in enumerate(cfgs):
            k, cin, tpg, kp = cfg["k"], cfg["cin"], cfg["tpg"], cfg["kp"]
            if k == 1:
                cols = a.astype(jnp.bfloat16)     # (m, CPAD)
            else:
                # roll-based im2col with dense K packing: tap t lands in
                # 128-lane group t//tpg at lane offset (t%tpg)*cin.
                ngroups = kp // CPAD
                groups = [None] * ngroups
                for t, (dy, dx) in enumerate(KTAPS):
                    off = (dy - 1) * w + (dx - 1)
                    sh = _roll_to(a, off, 0, m)               # sublane shift
                    if (dy, dx) in border:
                        sh = jnp.where(border[(dy, dx)], sh, 0.0)
                    lane = (t % tpg) * cin
                    sh = _roll_to(sh, -lane, 1, CPAD)         # lane placement
                    g = t // tpg
                    groups[g] = sh if groups[g] is None else groups[g] + sh
                groups = [grp.astype(jnp.bfloat16) for grp in groups]
                cols = groups[0] if ngroups == 1 else jnp.concatenate(groups, axis=-1)

            # single deep-K MXU matmul: bf16 operands, f32 accumulation
            wl = w_ref[w_off:w_off + kp, :]
            w_off += kp
            y = jnp.dot(cols, wl, preferred_element_type=jnp.float32)
            y = y + bn_ref[3 * li:3 * li + 1, :]                      # bias
            if cfg["bn"]:
                # one-pass batch stats (f32), BN folded to a single FMA
                mean = jnp.mean(y, axis=0, keepdims=True)
                mean_sq = jnp.mean(y * y, axis=0, keepdims=True)
                var = jnp.maximum(mean_sq - mean * mean, 0.0)
                scale = bn_ref[3 * li + 1:3 * li + 2, :] * jax.lax.rsqrt(var + BN_EPS)
                shift = bn_ref[3 * li + 2:3 * li + 3, :] - mean * scale
                y = y * scale + shift
            if cfg["relu"]:
                y = jnp.maximum(y, 0.0)
            a = y
        o_ref[...] = a.astype(o_ref.dtype)

    return kernel


def _run_stage(a2d, stage_packed, cfgs, n, h, w, roll_fwd):
    m = n * h * w
    kern = _make_stage_kernel(cfgs, n, h, w, roll_fwd)
    return pl.pallas_call(
        kern,
        out_shape=jax.ShapeDtypeStruct((m, CPAD), jnp.bfloat16),
        in_specs=[pl.BlockSpec(memory_space=pltpu.MemorySpace.VMEM)] * 3,
        out_specs=pl.BlockSpec(memory_space=pltpu.MemorySpace.VMEM),
    )(a2d, stage_packed["w"], stage_packed["bn"])


# ----------------------------------------------------------------------------
# pltpu.roll direction probe (makes the shift convention self-correcting)
# ----------------------------------------------------------------------------
def _probe_roll_direction():
    def kern(x_ref, o_ref):
        o_ref[...] = pltpu.roll(x_ref[...], 1, 1)

    x = jnp.broadcast_to(jnp.arange(128, dtype=jnp.float32), (8, 128))
    o = pl.pallas_call(
        kern,
        out_shape=jax.ShapeDtypeStruct((8, 128), jnp.float32),
        in_specs=[pl.BlockSpec(memory_space=pltpu.MemorySpace.VMEM)],
        out_specs=pl.BlockSpec(memory_space=pltpu.MemorySpace.VMEM),
    )(x)
    v = float(o[0, 0])
    if v == 127.0:
        return True          # matches jnp.roll: out[i] = in[i - shift]
    if v == 1.0:
        return False         # opposite convention
    raise RuntimeError(f"unexpected pltpu.roll semantics (probe value {v})")


# ----------------------------------------------------------------------------
# MaxPool2d(2, stride=2, return_indices=True) / MaxUnpool2d(2, stride=2) glue
# TODO(synk): fuse these into the adjacent stage kernels (pass indices in SMEM).
# ----------------------------------------------------------------------------
def _maxpool2x2_argmax(x):
    n, h, w, c = x.shape
    xr = x.reshape(n, h // 2, 2, w // 2, 2, c).transpose(0, 1, 3, 2, 4, 5)
    xr = xr.reshape(n, h // 2, w // 2, 4, c)
    return jnp.max(xr, axis=3), jnp.argmax(xr, axis=3)


def _maxunpool2x2(v, idx, out_h, out_w):
    n, h, w, c = v.shape
    onehot = jax.nn.one_hot(idx, 4, dtype=v.dtype)            # (n,h,w,c,4)
    scat = (v[..., None] * onehot).transpose(0, 1, 2, 4, 3)   # (n,h,w,4,c)
    scat = scat.reshape(n, h, w, 2, 2, c).transpose(0, 1, 3, 2, 4, 5)
    return scat.reshape(n, out_h, out_w, c)


# ----------------------------------------------------------------------------
# Deterministic synthetic parameters + packing for the Pallas path
# ----------------------------------------------------------------------------
def init_params(seed=0):
    key = jax.random.PRNGKey(seed)
    params = []
    for (k, cin, cout, transposed, bnr) in LAYERS:
        key, kw, kb, kg, kbt = jax.random.split(key, 5)
        std = 1.0 / float(cin * k * k) ** 0.5
        if transposed:
            # ConvTranspose2d weight (Cin, Cout, kH, kW); stride=1, pad=(k-1)//2
            # == Conv2d with spatially flipped, channel-swapped weights.
            wt = std * jax.random.normal(kw, (cin, cout, k, k), jnp.float32)
            w_hwio = jnp.transpose(jnp.flip(wt, axis=(2, 3)), (2, 3, 0, 1))
        else:
            w_hwio = std * jax.random.normal(kw, (k, k, cin, cout), jnp.float32)
        b = std * jax.random.normal(kb, (cout,), jnp.float32)
        if bnr:
            gamma = 1.0 + 0.1 * jax.random.normal(kg, (cout,), jnp.float32)
            beta = 0.1 * jax.random.normal(kbt, (cout,), jnp.float32)
        else:
            gamma = jnp.ones((cout,), jnp.float32)
            beta = jnp.zeros((cout,), jnp.float32)
        params.append({"w": w_hwio, "b": b, "gamma": gamma, "beta": beta})
    return params


def pack_params(layer_params):
    """Per stage: one stacked bf16 weight operand + one stacked f32 BN operand."""
    packed = []
    for stage, cfgs in zip(STAGES, STAGE_CFGS):
        w_blocks, bn_blocks = [], []
        for li, cfg in zip(stage, cfgs):
            p = layer_params[li]
            k, cin, cout = cfg["k"], cfg["cin"], cfg["cout"]
            tpg, kp = cfg["tpg"], cfg["kp"]
            wp = jnp.zeros((kp, CPAD), jnp.float32)
            if k == 1:
                wp = wp.at[:cin, :cout].set(p["w"][0, 0])
            else:
                for t, (dy, dx) in enumerate(KTAPS):
                    r0 = (t // tpg) * CPAD + (t % tpg) * cin
                    wp = wp.at[r0:r0 + cin, :cout].set(p["w"][dy, dx])
            w_blocks.append(wp.astype(jnp.bfloat16))
            blk = jnp.zeros((3, CPAD), jnp.float32)
            blk = blk.at[0, :cout].set(p["b"])
            blk = blk.at[1, :cout].set(p["gamma"])
            blk = blk.at[2, :cout].set(p["beta"])
            bn_blocks.append(blk)
        packed.append({"w": jnp.concatenate(w_blocks, axis=0),
                       "bn": jnp.concatenate(bn_blocks, axis=0)})
    return packed


# ----------------------------------------------------------------------------
# Forward pass (mirrors AutoEncoder.forward)
# ----------------------------------------------------------------------------
def _forward_impl(x_nchw, packed, roll_fwd=True):
    n, cin, h, w = x_nchw.shape
    x = jnp.transpose(x_nchw, (0, 2, 3, 1))                        # NCHW -> NHWC
    x = jnp.pad(x, ((0, 0), (0, 0), (0, 0), (0, CPAD - cin)))      # lane-pad channels
    a = x.reshape(n * h * w, CPAD)

    # encoder stage 1: conv1 + conv2
    a = _run_stage(a, packed[0], STAGE_CFGS[0], n, h, w, roll_fwd)
    enc1 = a.reshape(n, h, w, CPAD)
    pooled1, idx1 = _maxpool2x2_argmax(enc1)                       # size1 = (h, w)
    h2, w2 = h // 2, w // 2

    # encoder stage 2: conv3 + conv4 + conv5
    a = _run_stage(pooled1.reshape(n * h2 * w2, CPAD), packed[1],
                   STAGE_CFGS[1], n, h2, w2, roll_fwd)
    enc2 = a.reshape(n, h2, w2, CPAD)
    pooled2, idx2 = _maxpool2x2_argmax(enc2)                       # size2 = (h2, w2)

    # decoder stage 3: unpool2 -> deconv5 + deconv4 + deconv3
    up2 = _maxunpool2x2(pooled2, idx2, h2, w2)
    a = _run_stage(up2.reshape(n * h2 * w2, CPAD), packed[2],
                   STAGE_CFGS[2], n, h2, w2, roll_fwd)

    # decoder stage 4: unpool1 -> deconv2 + deconv1
    up1 = _maxunpool2x2(a.reshape(n, h2, w2, CPAD), idx1, h, w)
    a = _run_stage(up1.reshape(n * h * w, CPAD), packed[3],
                   STAGE_CFGS[3], n, h, w, roll_fwd)

    cfin = LAYERS[-1][2]                                           # 1
    y = a.reshape(n, h, w, CPAD)[..., :cfin].astype(jnp.float32)
    y = jnp.transpose(y, (0, 3, 1, 2))                             # NHWC -> NCHW
    e1 = enc1[..., :LAYERS[1][2]].astype(jnp.float32)
    e2 = enc2[..., :LAYERS[4][2]].astype(jnp.float32)
    return y, e1, e2


def autoencoder_forward(x_nchw, packed, roll_fwd=True):
    return _forward_impl(x_nchw, packed, roll_fwd)[0]


# ----------------------------------------------------------------------------
# Pure-JAX f32 reference (same math, lax.conv) used for validation
# ----------------------------------------------------------------------------
def reference_forward(x_nchw, layer_params):
    def apply(x, li):
        _, _, _, _, bnr = LAYERS[li]
        p = layer_params[li]
        y = jax.lax.conv_general_dilated(
            x, p["w"], (1, 1), "SAME",
            dimension_numbers=("NHWC", "HWIO", "NHWC"),
            precision=jax.lax.Precision.HIGHEST)
        y = y + p["b"]
        if bnr:
            mean = jnp.mean(y, axis=(0, 1, 2), keepdims=True)
            var = jnp.mean(jnp.square(y - mean), axis=(0, 1, 2), keepdims=True)
            y = (y - mean) * jax.lax.rsqrt(var + BN_EPS) * p["gamma"] + p["beta"]
            y = jnp.maximum(y, 0.0)
        return y

    _, _, h, w = x_nchw.shape
    out = jnp.transpose(x_nchw, (0, 2, 3, 1))
    out = apply(apply(out, 0), 1)
    enc1 = out
    out, i1 = _maxpool2x2_argmax(out)
    out = apply(apply(apply(out, 2), 3), 4)
    enc2 = out
    out, i2 = _maxpool2x2_argmax(out)
    out = _maxunpool2x2(out, i2, h // 2, w // 2)
    out = apply(apply(apply(out, 5), 6), 7)
    out = _maxunpool2x2(out, i1, h, w)
    out = apply(apply(out, 8), 9)
    return jnp.transpose(out, (0, 3, 1, 2)), enc1, enc2


if __name__ == "__main__":
    roll_fwd = _probe_roll_direction()
    layer_params = init_params(seed=0)
    packed = pack_params(layer_params)

    x = jax.random.normal(jax.random.PRNGKey(0), (2, 1, 16, 16), jnp.float32)

    fwd = jax.jit(functools.partial(_forward_impl, roll_fwd=roll_fwd))
    y, e1, e2 = fwd(x, packed)
    jax.block_until_ready(y)

    assert y.shape == (2, 1, 16, 16), y.shape
    assert y.dtype == jnp.float32
    assert bool(jnp.all(jnp.isfinite(y)))

    y_ref, e1_ref, e2_ref = jax.jit(reference_forward)(x, layer_params)

    def rel(a, b):
        return float(jnp.linalg.norm(a - b) / (jnp.linalg.norm(b) + 1e-6))

    r1, r2, rf = rel(e1, e1_ref), rel(e2, e2_ref), rel(y, y_ref)
    # Encoder activations are insensitive to MaxPool argmax tie-breaks, so they
    # get tighter bounds; the final output can legitimately drift where bf16
    # flips a near-tied argmax (value lands in a different unpool position),
    # so only a loose structural bound is asserted there.
    assert r1 < 0.1 and r2 < 0.1 and rf < 0.5, (r1, r2, rf)
    print("KERNEL_OK")
</pallas_src>

<mosaic_0001>
module attributes {stable_mosaic.version = 11 : i64} {
  func.func @kern(%arg0: memref<8x128xf32, #tpu.memory_space<vmem>>, %arg1: memref<8x128xf32, #tpu.memory_space<vmem>>) attributes {dimension_semantics = [], scalar_prefetch = 0 : i64, scratch_operands = 0 : i64, tpu.core_type = #tpu.core_type<tc>} {
    %c0 = arith.constant 0 : index
    %c0_0 = arith.constant 0 : index
    %0 = vector.load %arg0[%c0, %c0_0] : memref<8x128xf32, #tpu.memory_space<vmem>>, vector<8x128xf32>
    %c1_i32 = arith.constant 1 : i32
    %1 = tpu.dynamic_rotate %0 by %c1_i32 dim 1 : vector<8x128xf32>, i32 -> vector<8x128xf32>
    %c0_1 = arith.constant 0 : index
    %c0_2 = arith.constant 0 : index
    %2 = vector.load %arg1[%c0_1, %c0_2] : memref<8x128xf32, #tpu.memory_space<vmem>>, vector<8x128xf32>
    tpu.vector_store %arg1[%c0_1, %c0_2], %1 {strides = array<i32>} : memref<8x128xf32, #tpu.memory_space<vmem>>, vector<8x128xf32>,
    return
  }
}

</mosaic_0001>

<llo_original>
// kernel: tpu_custom_call.1
$region0: #{tpu_custom_call.1}
  #allocation0 [shape = 'u32[]', space=smem, size = 0x4, offset = 0x4, fixed_abs, tag = 'smem constant byte address 0x4 - core index']
  #allocation1 [shape = 'u32[72,128]{1,0:T(1,128)}', space=vmem, size = 0x9000, scoped, tag = 'internal scratch']
  %s0 = inlined_call_operand.hbm [shape: f32[8,128], index: 0, kind: input, shape index: {}]
  %s1 = inlined_call_operand.hbm [shape: f32[8,128], index: 1, kind: output, shape index: {}]
  %s2 = sld [smem:[#allocation0]]
  $region18: #{tpu_custom_call.1} parent=0
    _
  %s4 = ssub.s32 1, %s2
  %s5 = scalar_select 0, %s4, %s2
  $region1: #{tpu_custom_call.1} parent=0
    #allocation2 [shape = 'u8[4096]{0}', space=vmem, size = 0x1000, scoped, tag = 'input window, operand 0, single buffered']
    #allocation3 [shape = 's32[1]{0}', space=sflag, size = 0x4, scoped, tag = 'scoped memory for tpu_custom_call.1']
    #allocation4 [shape = 's32[1]{0}', space=sflag, size = 0x4, scoped, tag = 'scoped memory for tpu_custom_call.1']
    #allocation5 [shape = 'u8[4096]{0}', space=vmem, size = 0x1000, scoped, tag = 'output window, operand 0, single buffered']
    %6 = vsyncpa [#allocation3], 0
    %7 = vsyncpa [#allocation4], 0
    // Predicated region
    $region2: #{tpu_custom_call.1} parent=1 // pred_check
      _
    $region3: #{tpu_custom_call.1} parent=1 // pred_check_branch
      %9 = sbr.rel (0) target = $region5
    $region4: #{tpu_custom_call.1} parent=1 // pred_region
      %11 = vsyncadd [#allocation3], 0
      %s13 = sshll.u32 %s0, 4
      %s14 = int_to_ptr.hbm [resolvable:$true] %s13
      %s15 = sshll.u32 [#allocation2], 4
      %s16 = int_to_ptr.vmem [resolvable:$true] %s15
      %18 = dma.hbm_to_vmem [thread:$0]  %s14, 128, %s16, [#allocation3]
    $region5: #{tpu_custom_call.1} parent=1 // pred_fallthru
      _
    // Predicated region
    $region6: #{tpu_custom_call.1} parent=1 // pred_check
      _
    $region7: #{tpu_custom_call.1} parent=1 // pred_check_branch
      %20 = sbr.rel (0) target = $region9
    $region8: #{tpu_custom_call.1} parent=1 // pred_region
      %22 = dma.done [#allocation3], 128
    $region9: #{tpu_custom_call.1} parent=1 // pred_fallthru
      _
    %v23 = vld [vmem:[#allocation2] sm:$0xff]
    %24 = vrot.lane.b32.xlu0 %v23, 1
    %v25 = vpop.permute.xlu0 %24
    %26 = vst [vmem:[#allocation5] sm:$0xff] %v25
    // Predicated region
    $region10: #{tpu_custom_call.1} parent=1 // pred_check
      _
    $region11: #{tpu_custom_call.1} parent=1 // pred_check_branch
      %28 = sbr.rel (0) target = $region13
    $region12: #{tpu_custom_call.1} parent=1 // pred_region
      %30 = vsyncadd [#allocation4], 0
      %s32 = sshll.u32 [#allocation5], 4
      %s33 = int_to_ptr.vmem [resolvable:$true] %s32
      %s34 = sshll.u32 %s1, 4
      %s35 = int_to_ptr.hbm [resolvable:$true] %s34
      %37 = dma.vmem_to_hbm [thread:$0]  %s33, 128, %s35, [#allocation4]
    $region13: #{tpu_custom_call.1} parent=1 // pred_fallthru
      _
    // Predicated region
    $region14: #{tpu_custom_call.1} parent=1 // pred_check
      _
    $region15: #{tpu_custom_call.1} parent=1 // pred_check_branch
      %39 = sbr.rel (0) target = $region17
    $region16: #{tpu_custom_call.1} parent=1 // pred_region
      %41 = dma.done [#allocation4], 128
    $region17: #{tpu_custom_call.1} parent=1 // pred_fallthru
      _
    %42 = vsyncpa [#allocation3], 1
    %43 = vsyncpa [#allocation4], 1

</llo_original>
